<compile_context>
chip_gen: v5e
topology: v5e:2x2
jax: 0.10.0
libtpu: 0.0.40
codegen_flags: <defaults>
</compile_context>

<pallas_src>
import functools

import jax
import jax.numpy as jnp
from jax.experimental import pallas as pl
from jax.experimental.pallas import tpu as pltpu

SELU_ALPHA = 1.6732632423543772848170429916717
SELU_SCALE = 1.0507009873554804934193349852946


def _selu(x):
    return SELU_SCALE * jnp.where(x > 0, x, SELU_ALPHA * (jnp.exp(x) - 1.0))


# ----------------------------------------------------------------------------
# Fused kernel: conv1 -> SELU -> conv2 -> dictionary matmul (one batch / step)
# ----------------------------------------------------------------------------
def fused_transform_kernel(x_ref, w1_ref, w2_ref, t_ref,       # inputs
                           x2_ref, y_ref,                       # outputs
                           im2col1_ref, im2col2_ref, flat_ref,  # VMEM scratch
                           *, L, K1, K2, C, O1, O2):
    def fill_im2col(dst_ref, src, K, rows):
        """dst[k*rows + c, l] = src[c, l + k - K//2], zero outside [0, L)."""
        pad = K // 2
        for k in range(K):                       # K is static (unrolled)
            s = k - pad
            r0 = k * rows
            if s == 0:
                dst_ref[r0:r0 + rows, :] = src
            elif s < 0:
                dst_ref[r0:r0 + rows, (-s):L] = src[:, 0:L + s]
                dst_ref[r0:r0 + rows, 0:(-s)] = jnp.zeros((rows, -s), jnp.float32)
            else:
                dst_ref[r0:r0 + rows, 0:L - s] = src[:, s:L]
                dst_ref[r0:r0 + rows, L - s:L] = jnp.zeros((rows, s), jnp.float32)

    # ---- conv1 as a single im2col matmul: (O1, K1*C) @ (K1*C, L) -> (O1, L)
    x = x_ref[0].astype(jnp.float32)                         # (C, L)
    fill_im2col(im2col1_ref, x, K1, C)
    h1 = jnp.dot(w1_ref[...], im2col1_ref[...],
                 preferred_element_type=jnp.float32)         # (O1, L)

    # ---- SELU (VPU/EUP)
    h1 = _selu(h1)

    # ---- conv2 as a single im2col matmul: (O2, K2*O1) @ (K2*O1, L) -> (O2, L)
    fill_im2col(im2col2_ref, h1, K2, O1)
    h2 = jnp.dot(w2_ref[...], im2col2_ref[...],
                 preferred_element_type=jnp.float32)         # (O2, L)

    # ---- first module output: h2 for this batch element
    x2_ref[0] = h2.astype(x2_ref.dtype)

    # ---- flatten h2 (row-major, matches torch .view(B, -1)) into (1, O2*L)
    for o in range(O2):                                      # static unroll
        flat_ref[:, o * L:(o + 1) * L] = h2[o:o + 1, :]

    # ---- dictionary matmul, lane-dense output row: (1, F) @ (F, A) -> (1, A)
    y_row = jnp.dot(flat_ref[...], t_ref[...],
                    preferred_element_type=jnp.float32)      # (1, A)
    y_ref[0] = y_row.astype(y_ref.dtype)


# ----------------------------------------------------------------------------
# Wrapper: weight flattening (glue) + single pallas_call
# ----------------------------------------------------------------------------
def transform_forward(x, w1, w2, T):
    B, C, L = x.shape
    O1, _, K1 = w1.shape
    O2, _, K2 = w2.shape
    A, Fdim = T.shape
    assert Fdim == O2 * L
    # TODO(synk): even kernel sizes change the PyTorch 'same' output length
    # (L+1); only odd ksize (module default 3) is supported here.
    assert K1 % 2 == 1 and K2 % 2 == 1

    # Pre-flatten conv weights so each conv is one matmul:
    #   w_flat[o, k*Cin + c] = w[o, c, k]          (pure layout glue)
    w1f = jnp.transpose(w1, (0, 2, 1)).reshape(O1, K1 * C)       # (O1, K1*C)
    w2f = jnp.transpose(w2, (0, 2, 1)).reshape(O2, K2 * O1)      # (O2, K2*O1)
    t_t = T.T                                                    # (F, A)

    kernel = functools.partial(fused_transform_kernel,
                               L=L, K1=K1, K2=K2, C=C, O1=O1, O2=O2)

    x2, y_bt = pl.pallas_call(
        kernel,
        out_shape=(
            jax.ShapeDtypeStruct((B, O2, L), x.dtype),           # h2
            jax.ShapeDtypeStruct((B, 1, A), jnp.float32),        # y rows (lane-dense)
        ),
        grid_spec=pltpu.PrefetchScalarGridSpec(
            num_scalar_prefetch=0,
            grid=(B,),
            in_specs=[
                pl.BlockSpec((1, C, L), lambda b: (b, 0, 0)),
                pl.BlockSpec((O1, K1 * C), lambda b: (0, 0)),
                pl.BlockSpec((O2, K2 * O1), lambda b: (0, 0)),
                pl.BlockSpec((Fdim, A), lambda b: (0, 0)),
            ],
            out_specs=[
                pl.BlockSpec((1, O2, L), lambda b: (b, 0, 0)),
                pl.BlockSpec((1, 1, A), lambda b: (b, 0, 0)),
            ],
            scratch_shapes=[
                pltpu.VMEM((K1 * C, L), jnp.float32),            # conv1 im2col
                pltpu.VMEM((K2 * O1, L), jnp.float32),           # conv2 im2col
                pltpu.VMEM((1, Fdim), jnp.float32),              # flattened h2
            ],
        ),
        compiler_params=pltpu.CompilerParams(
            dimension_semantics=("parallel",)),                  # batch shards on v7x
    )(x, w1f, w2f, t_t)

    # (B, 1, A) -> (A, B) to match torch.mm(T, h2.view(B, -1).t()); tiny glue.
    y = y_bt.reshape(B, A).T
    return x2, y


# ----------------------------------------------------------------------------
# Pure-JAX reference (verification only)
# ----------------------------------------------------------------------------
def reference_forward(x, w1, w2, T):
    pad1 = w1.shape[2] // 2
    h = jax.lax.conv_general_dilated(
        x, w1, window_strides=(1,), padding=[(pad1, pad1)],
        dimension_numbers=("NCH", "OIH", "NCH"))
    h = _selu(h)
    pad2 = w2.shape[2] // 2
    h2 = jax.lax.conv_general_dilated(
        h, w2, window_strides=(1,), padding=[(pad2, pad2)],
        dimension_numbers=("NCH", "OIH", "NCH"))
    y = T @ h2.reshape(h2.shape[0], -1).T
    return h2, y


if __name__ == "__main__":
    # Module hyper-parameters (Transform defaults, maxpool1/2 = False).
    B, C_in, L = 2, 4, 16          # input_shape = [2, 4, 16]
    out_planes1, out_planes2 = 8, 16
    ksize1, ksize2 = 3, 3
    num_channels, atom_ratio = 2, 0.5

    dim1 = L                                       # 'same' length, no maxpool
    num_features = out_planes2 * dim1              # 256
    num_atoms = int(num_features * atom_ratio * num_channels)   # 256

    key = jax.random.PRNGKey(0)
    kx, k1, k2, kT = jax.random.split(key, 4)

    x = jax.random.normal(kx, (B, C_in, L), dtype=jnp.float32)
    w1 = 0.2 * jax.random.normal(k1, (out_planes1, C_in, ksize1), dtype=jnp.float32)
    w2 = 0.2 * jax.random.normal(k2, (out_planes2, out_planes1, ksize2), dtype=jnp.float32)
    T = jax.random.normal(kT, (num_atoms, num_features), dtype=jnp.float32)

    x2, y = transform_forward(x, w1, w2, T)
    jax.block_until_ready((x2, y))

    x2_ref, y_ref = reference_forward(x, w1, w2, T)
    assert x2.shape == (B, out_planes2, dim1)
    assert y.shape == (num_atoms, B)
    assert jnp.allclose(x2, x2_ref, atol=1e-2, rtol=1e-2)
    assert jnp.allclose(y, y_ref, atol=1e-2, rtol=1e-2)

    print("KERNEL_OK")
</pallas_src>

<mosaic_0001>
module attributes {stable_mosaic.version = 11 : i64} {
  func.func @fused_transform_kernel(%arg0: i32, %arg1: memref<1x4x16xf32, #tpu.memory_space<vmem>>, %arg2: memref<8x12xf32, #tpu.memory_space<vmem>>, %arg3: memref<16x24xf32, #tpu.memory_space<vmem>>, %arg4: memref<256x256xf32, #tpu.memory_space<vmem>>, %arg5: memref<1x16x16xf32, #tpu.memory_space<vmem>>, %arg6: memref<1x1x256xf32, #tpu.memory_space<vmem>>, %arg7: memref<12x16xf32, #tpu.memory_space<vmem>>, %arg8: memref<24x16xf32, #tpu.memory_space<vmem>>, %arg9: memref<1x256xf32, #tpu.memory_space<vmem>>) attributes {dimension_semantics = [#tpu.dimension_semantics<parallel>], iteration_bounds = array<i64: 2>, scalar_prefetch = 0 : i64, scratch_operands = 3 : i64, tpu.core_type = #tpu.core_type<tc>, window_params = [{transform_indices = @transform_0, window_bounds = array<i64: 1, 4, 16>}, {pipeline_mode = #tpu.pipeline_mode<synchronous>, transform_indices = @transform_1, window_bounds = array<i64: 8, 12>}, {pipeline_mode = #tpu.pipeline_mode<synchronous>, transform_indices = @transform_2, window_bounds = array<i64: 16, 24>}, {pipeline_mode = #tpu.pipeline_mode<synchronous>, transform_indices = @transform_3, window_bounds = array<i64: 256, 256>}, {transform_indices = @transform_4, window_bounds = array<i64: 1, 16, 16>}, {transform_indices = @transform_5, window_bounds = array<i64: 1, 1, 256>}]} {
    %c0 = arith.constant 0 : index
    %c0_0 = arith.constant 0 : index
    %c0_1 = arith.constant 0 : index
    %0 = vector.load %arg1[%c0, %c0_0, %c0_1] : memref<1x4x16xf32, #tpu.memory_space<vmem>>, vector<1x4x16xf32>
    %1 = vector.shape_cast %0 : vector<1x4x16xf32> to vector<4x16xf32>
    %2 = vector.extract_strided_slice %1 {offsets = [0, 0], sizes = [4, 15], strides = [1, 1]} : vector<4x16xf32> to vector<4x15xf32>
    %c0_2 = arith.constant 0 : index
    %c1 = arith.constant 1 : index
    %3 = vector.load %arg7[%c0_2, %c1] : memref<12x16xf32, #tpu.memory_space<vmem>>, vector<4x15xf32>
    tpu.vector_store %arg7[%c0_2, %c1], %2 {strides = array<i32>} : memref<12x16xf32, #tpu.memory_space<vmem>>, vector<4x15xf32>,
    %cst = arith.constant 0.000000e+00 : f32
    %4 = vector.broadcast %cst : f32 to vector<4x1xf32>
    %c0_3 = arith.constant 0 : index
    %c0_4 = arith.constant 0 : index
    %5 = vector.load %arg7[%c0_3, %c0_4] : memref<12x16xf32, #tpu.memory_space<vmem>>, vector<4x1xf32>
    tpu.vector_store %arg7[%c0_3, %c0_4], %4 {strides = array<i32>} : memref<12x16xf32, #tpu.memory_space<vmem>>, vector<4x1xf32>,
    %c4 = arith.constant 4 : index
    %c0_5 = arith.constant 0 : index
    %6 = vector.load %arg7[%c4, %c0_5] : memref<12x16xf32, #tpu.memory_space<vmem>>, vector<4x16xf32>
    tpu.vector_store %arg7[%c4, %c0_5], %1 {strides = array<i32>} : memref<12x16xf32, #tpu.memory_space<vmem>>, vector<4x16xf32>,
    %7 = vector.extract_strided_slice %1 {offsets = [0, 1], sizes = [4, 15], strides = [1, 1]} : vector<4x16xf32> to vector<4x15xf32>
    %c8 = arith.constant 8 : index
    %c0_6 = arith.constant 0 : index
    %8 = vector.load %arg7[%c8, %c0_6] : memref<12x16xf32, #tpu.memory_space<vmem>>, vector<4x15xf32>
    tpu.vector_store %arg7[%c8, %c0_6], %7 {strides = array<i32>} : memref<12x16xf32, #tpu.memory_space<vmem>>, vector<4x15xf32>,
    %cst_7 = arith.constant 0.000000e+00 : f32
    %9 = vector.broadcast %cst_7 : f32 to vector<4x1xf32>
    %c8_8 = arith.constant 8 : index
    %c15 = arith.constant 15 : index
    %10 = vector.load %arg7[%c8_8, %c15] : memref<12x16xf32, #tpu.memory_space<vmem>>, vector<4x1xf32>
    tpu.vector_store %arg7[%c8_8, %c15], %9 {strides = array<i32>} : memref<12x16xf32, #tpu.memory_space<vmem>>, vector<4x1xf32>,
    %c0_9 = arith.constant 0 : index
    %c0_10 = arith.constant 0 : index
    %11 = vector.load %arg2[%c0_9, %c0_10] : memref<8x12xf32, #tpu.memory_space<vmem>>, vector<8x12xf32>
    %c0_11 = arith.constant 0 : index
    %c0_12 = arith.constant 0 : index
    %12 = vector.load %arg7[%c0_11, %c0_12] : memref<12x16xf32, #tpu.memory_space<vmem>>, vector<12x16xf32>
    %cst_13 = arith.constant dense<0.000000e+00> : vector<8x16xf32>
    %13 = tpu.matmul %11, %12, %cst_13 {dimension_numbers = #tpu.dot_dimension_numbers<[1], [0], [0], [1], [0, 0, 1, 1], [], []>} : vector<8x12xf32>, vector<12x16xf32>, vector<8x16xf32> -> vector<8x16xf32>
    %cst_14 = arith.constant 0.000000e+00 : f32
    %14 = vector.broadcast %cst_14 : f32 to vector<8x16xf32>
    %15 = arith.cmpf ogt, %13, %14 : vector<8x16xf32>
    %16 = math.exp %13 : vector<8x16xf32>
    %cst_15 = arith.constant 1.000000e+00 : f32
    %17 = vector.broadcast %cst_15 : f32 to vector<8x16xf32>
    %18 = arith.subf %16, %17 : vector<8x16xf32>
    %cst_16 = arith.constant 1.67326319 : f32
    %19 = vector.broadcast %cst_16 : f32 to vector<8x16xf32>
    %20 = arith.mulf %19, %18 : vector<8x16xf32>
    %21 = arith.select %15, %13, %20 : vector<8x16xi1>, vector<8x16xf32>
    %cst_17 = arith.constant 1.05070102 : f32
    %22 = vector.broadcast %cst_17 : f32 to vector<8x16xf32>
    %23 = arith.mulf %22, %21 : vector<8x16xf32>
    %24 = vector.extract_strided_slice %23 {offsets = [0, 0], sizes = [8, 15], strides = [1, 1]} : vector<8x16xf32> to vector<8x15xf32>
    %c0_18 = arith.constant 0 : index
    %c1_19 = arith.constant 1 : index
    %25 = vector.load %arg8[%c0_18, %c1_19] : memref<24x16xf32, #tpu.memory_space<vmem>>, vector<8x15xf32>
    tpu.vector_store %arg8[%c0_18, %c1_19], %24 {strides = array<i32>} : memref<24x16xf32, #tpu.memory_space<vmem>>, vector<8x15xf32>,
    %cst_20 = arith.constant 0.000000e+00 : f32
    %26 = vector.broadcast %cst_20 : f32 to vector<8x1xf32>
    %c0_21 = arith.constant 0 : index
    %c0_22 = arith.constant 0 : index
    %27 = vector.load %arg8[%c0_21, %c0_22] : memref<24x16xf32, #tpu.memory_space<vmem>>, vector<8x1xf32>
    tpu.vector_store %arg8[%c0_21, %c0_22], %26 {strides = array<i32>} : memref<24x16xf32, #tpu.memory_space<vmem>>, vector<8x1xf32>,
    %c8_23 = arith.constant 8 : index
    %c0_24 = arith.constant 0 : index
    %28 = vector.load %arg8[%c8_23, %c0_24] : memref<24x16xf32, #tpu.memory_space<vmem>>, vector<8x16xf32>
    tpu.vector_store %arg8[%c8_23, %c0_24], %23 {strides = array<i32>} : memref<24x16xf32, #tpu.memory_space<vmem>>, vector<8x16xf32>,
    %29 = vector.extract_strided_slice %23 {offsets = [0, 1], sizes = [8, 15], strides = [1, 1]} : vector<8x16xf32> to vector<8x15xf32>
    %c16 = arith.constant 16 : index
    %c0_25 = arith.constant 0 : index
    %30 = vector.load %arg8[%c16, %c0_25] : memref<24x16xf32, #tpu.memory_space<vmem>>, vector<8x15xf32>
    tpu.vector_store %arg8[%c16, %c0_25], %29 {strides = array<i32>} : memref<24x16xf32, #tpu.memory_space<vmem>>, vector<8x15xf32>,
    %cst_26 = arith.constant 0.000000e+00 : f32
    %31 = vector.broadcast %cst_26 : f32 to vector<8x1xf32>
    %c16_27 = arith.constant 16 : index
    %c15_28 = arith.constant 15 : index
    %32 = vector.load %arg8[%c16_27, %c15_28] : memref<24x16xf32, #tpu.memory_space<vmem>>, vector<8x1xf32>
    tpu.vector_store %arg8[%c16_27, %c15_28], %31 {strides = array<i32>} : memref<24x16xf32, #tpu.memory_space<vmem>>, vector<8x1xf32>,
    %c0_29 = arith.constant 0 : index
    %c0_30 = arith.constant 0 : index
    %33 = vector.load %arg3[%c0_29, %c0_30] : memref<16x24xf32, #tpu.memory_space<vmem>>, vector<16x24xf32>
    %c0_31 = arith.constant 0 : index
    %c0_32 = arith.constant 0 : index
    %34 = vector.load %arg8[%c0_31, %c0_32] : memref<24x16xf32, #tpu.memory_space<vmem>>, vector<24x16xf32>
    %cst_33 = arith.constant dense<0.000000e+00> : vector<16x16xf32>
    %35 = tpu.matmul %33, %34, %cst_33 {dimension_numbers = #tpu.dot_dimension_numbers<[1], [0], [0], [1], [0, 0, 1, 1], [], []>} : vector<16x24xf32>, vector<24x16xf32>, vector<16x16xf32> -> vector<16x16xf32>
    %c0_34 = arith.constant 0 : index
    %c0_35 = arith.constant 0 : index
    %c0_36 = arith.constant 0 : index
    %36 = vector.load %arg5[%c0_34, %c0_35, %c0_36] : memref<1x16x16xf32, #tpu.memory_space<vmem>>, vector<1x16x16xf32>
    %37 = vector.shape_cast %36 : vector<1x16x16xf32> to vector<16x16xf32>
    %38 = vector.shape_cast %35 : vector<16x16xf32> to vector<1x16x16xf32>
    tpu.vector_store %arg5[%c0_34, %c0_35, %c0_36], %38 {strides = array<i32>} : memref<1x16x16xf32, #tpu.memory_space<vmem>>, vector<1x16x16xf32>,
    %39 = vector.extract_strided_slice %35 {offsets = [0, 0], sizes = [1, 16], strides = [1, 1]} : vector<16x16xf32> to vector<1x16xf32>
    %c0_37 = arith.constant 0 : index
    %c0_38 = arith.constant 0 : index
    %40 = vector.load %arg9[%c0_37, %c0_38] : memref<1x256xf32, #tpu.memory_space<vmem>>, vector<1x16xf32>
    tpu.vector_store %arg9[%c0_37, %c0_38], %39 {strides = array<i32>} : memref<1x256xf32, #tpu.memory_space<vmem>>, vector<1x16xf32>,
    %41 = vector.extract_strided_slice %35 {offsets = [1, 0], sizes = [1, 16], strides = [1, 1]} : vector<16x16xf32> to vector<1x16xf32>
    %c0_39 = arith.constant 0 : index
    %c16_40 = arith.constant 16 : index
    %42 = vector.load %arg9[%c0_39, %c16_40] : memref<1x256xf32, #tpu.memory_space<vmem>>, vector<1x16xf32>
    tpu.vector_store %arg9[%c0_39, %c16_40], %41 {strides = array<i32>} : memref<1x256xf32, #tpu.memory_space<vmem>>, vector<1x16xf32>,
    %43 = vector.extract_strided_slice %35 {offsets = [2, 0], sizes = [1, 16], strides = [1, 1]} : vector<16x16xf32> to vector<1x16xf32>
    %c0_41 = arith.constant 0 : index
    %c32 = arith.constant 32 : index
    %44 = vector.load %arg9[%c0_41, %c32] : memref<1x256xf32, #tpu.memory_space<vmem>>, vector<1x16xf32>
    tpu.vector_store %arg9[%c0_41, %c32], %43 {strides = array<i32>} : memref<1x256xf32, #tpu.memory_space<vmem>>, vector<1x16xf32>,
    %45 = vector.extract_strided_slice %35 {offsets = [3, 0], sizes = [1, 16], strides = [1, 1]} : vector<16x16xf32> to vector<1x16xf32>
    %c0_42 = arith.constant 0 : index
    %c48 = arith.constant 48 : index
    %46 = vector.load %arg9[%c0_42, %c48] : memref<1x256xf32, #tpu.memory_space<vmem>>, vector<1x16xf32>
    tpu.vector_store %arg9[%c0_42, %c48], %45 {strides = array<i32>} : memref<1x256xf32, #tpu.memory_space<vmem>>, vector<1x16xf32>,
    %47 = vector.extract_strided_slice %35 {offsets = [4, 0], sizes = [1, 16], strides = [1, 1]} : vector<16x16xf32> to vector<1x16xf32>
    %c0_43 = arith.constant 0 : index
    %c64 = arith.constant 64 : index
    %48 = vector.load %arg9[%c0_43, %c64] : memref<1x256xf32, #tpu.memory_space<vmem>>, vector<1x16xf32>
    tpu.vector_store %arg9[%c0_43, %c64], %47 {strides = array<i32>} : memref<1x256xf32, #tpu.memory_space<vmem>>, vector<1x16xf32>,
    %49 = vector.extract_strided_slice %35 {offsets = [5, 0], sizes = [1, 16], strides = [1, 1]} : vector<16x16xf32> to vector<1x16xf32>
    %c0_44 = arith.constant 0 : index
    %c80 = arith.constant 80 : index
    %50 = vector.load %arg9[%c0_44, %c80] : memref<1x256xf32, #tpu.memory_space<vmem>>, vector<1x16xf32>
    tpu.vector_store %arg9[%c0_44, %c80], %49 {strides = array<i32>} : memref<1x256xf32, #tpu.memory_space<vmem>>, vector<1x16xf32>,
    %51 = vector.extract_strided_slice %35 {offsets = [6, 0], sizes = [1, 16], strides = [1, 1]} : vector<16x16xf32> to vector<1x16xf32>
    %c0_45 = arith.constant 0 : index
    %c96 = arith.constant 96 : index
    %52 = vector.load %arg9[%c0_45, %c96] : memref<1x256xf32, #tpu.memory_space<vmem>>, vector<1x16xf32>
    tpu.vector_store %arg9[%c0_45, %c96], %51 {strides = array<i32>} : memref<1x256xf32, #tpu.memory_space<vmem>>, vector<1x16xf32>,
    %53 = vector.extract_strided_slice %35 {offsets = [7, 0], sizes = [1, 16], strides = [1, 1]} : vector<16x16xf32> to vector<1x16xf32>
    %c0_46 = arith.constant 0 : index
    %c112 = arith.constant 112 : index
    %54 = vector.load %arg9[%c0_46, %c112] : memref<1x256xf32, #tpu.memory_space<vmem>>, vector<1x16xf32>
    tpu.vector_store %arg9[%c0_46, %c112], %53 {strides = array<i32>} : memref<1x256xf32, #tpu.memory_space<vmem>>, vector<1x16xf32>,
    %55 = vector.extract_strided_slice %35 {offsets = [8, 0], sizes = [1, 16], strides = [1, 1]} : vector<16x16xf32> to vector<1x16xf32>
    %c0_47 = arith.constant 0 : index
    %c128 = arith.constant 128 : index
    %56 = vector.load %arg9[%c0_47, %c128] : memref<1x256xf32, #tpu.memory_space<vmem>>, vector<1x16xf32>
    tpu.vector_store %arg9[%c0_47, %c128], %55 {strides = array<i32>} : memref<1x256xf32, #tpu.memory_space<vmem>>, vector<1x16xf32>,
    %57 = vector.extract_strided_slice %35 {offsets = [9, 0], sizes = [1, 16], strides = [1, 1]} : vector<16x16xf32> to vector<1x16xf32>
    %c0_48 = arith.constant 0 : index
    %c144 = arith.constant 144 : index
    %58 = vector.load %arg9[%c0_48, %c144] : memref<1x256xf32, #tpu.memory_space<vmem>>, vector<1x16xf32>
    tpu.vector_store %arg9[%c0_48, %c144], %57 {strides = array<i32>} : memref<1x256xf32, #tpu.memory_space<vmem>>, vector<1x16xf32>,
    %59 = vector.extract_strided_slice %35 {offsets = [10, 0], sizes = [1, 16], strides = [1, 1]} : vector<16x16xf32> to vector<1x16xf32>
    %c0_49 = arith.constant 0 : index
    %c160 = arith.constant 160 : index
    %60 = vector.load %arg9[%c0_49, %c160] : memref<1x256xf32, #tpu.memory_space<vmem>>, vector<1x16xf32>
    tpu.vector_store %arg9[%c0_49, %c160], %59 {strides = array<i32>} : memref<1x256xf32, #tpu.memory_space<vmem>>, vector<1x16xf32>,
    %61 = vector.extract_strided_slice %35 {offsets = [11, 0], sizes = [1, 16], strides = [1, 1]} : vector<16x16xf32> to vector<1x16xf32>
    %c0_50 = arith.constant 0 : index
    %c176 = arith.constant 176 : index
    %62 = vector.load %arg9[%c0_50, %c176] : memref<1x256xf32, #tpu.memory_space<vmem>>, vector<1x16xf32>
    tpu.vector_store %arg9[%c0_50, %c176], %61 {strides = array<i32>} : memref<1x256xf32, #tpu.memory_space<vmem>>, vector<1x16xf32>,
    %63 = vector.extract_strided_slice %35 {offsets = [12, 0], sizes = [1, 16], strides = [1, 1]} : vector<16x16xf32> to vector<1x16xf32>
    %c0_51 = arith.constant 0 : index
    %c192 = arith.constant 192 : index
    %64 = vector.load %arg9[%c0_51, %c192] : memref<1x256xf32, #tpu.memory_space<vmem>>, vector<1x16xf32>
    tpu.vector_store %arg9[%c0_51, %c192], %63 {strides = array<i32>} : memref<1x256xf32, #tpu.memory_space<vmem>>, vector<1x16xf32>,
    %65 = vector.extract_strided_slice %35 {offsets = [13, 0], sizes = [1, 16], strides = [1, 1]} : vector<16x16xf32> to vector<1x16xf32>
    %c0_52 = arith.constant 0 : index
    %c208 = arith.constant 208 : index
    %66 = vector.load %arg9[%c0_52, %c208] : memref<1x256xf32, #tpu.memory_space<vmem>>, vector<1x16xf32>
    tpu.vector_store %arg9[%c0_52, %c208], %65 {strides = array<i32>} : memref<1x256xf32, #tpu.memory_space<vmem>>, vector<1x16xf32>,
    %67 = vector.extract_strided_slice %35 {offsets = [14, 0], sizes = [1, 16], strides = [1, 1]} : vector<16x16xf32> to vector<1x16xf32>
    %c0_53 = arith.constant 0 : index
    %c224 = arith.constant 224 : index
    %68 = vector.load %arg9[%c0_53, %c224] : memref<1x256xf32, #tpu.memory_space<vmem>>, vector<1x16xf32>
    tpu.vector_store %arg9[%c0_53, %c224], %67 {strides = array<i32>} : memref<1x256xf32, #tpu.memory_space<vmem>>, vector<1x16xf32>,
    %69 = vector.extract_strided_slice %35 {offsets = [15, 0], sizes = [1, 16], strides = [1, 1]} : vector<16x16xf32> to vector<1x16xf32>
    %c0_54 = arith.constant 0 : index
    %c240 = arith.constant 240 : index
    %70 = vector.load %arg9[%c0_54, %c240] : memref<1x256xf32, #tpu.memory_space<vmem>>, vector<1x16xf32>
    tpu.vector_store %arg9[%c0_54, %c240], %69 {strides = array<i32>} : memref<1x256xf32, #tpu.memory_space<vmem>>, vector<1x16xf32>,
    %c0_55 = arith.constant 0 : index
    %c0_56 = arith.constant 0 : index
    %71 = vector.load %arg9[%c0_55, %c0_56] : memref<1x256xf32, #tpu.memory_space<vmem>>, vector<1x256xf32>
    %c0_57 = arith.constant 0 : index
    %c0_58 = arith.constant 0 : index
    %72 = vector.load %arg4[%c0_57, %c0_58] : memref<256x256xf32, #tpu.memory_space<vmem>>, vector<256x256xf32>
    %cst_59 = arith.constant dense<0.000000e+00> : vector<1x256xf32>
    %73 = tpu.matmul %71, %72, %cst_59 {dimension_numbers = #tpu.dot_dimension_numbers<[1], [0], [0], [1], [0, 0, 1, 1], [], []>} : vector<1x256xf32>, vector<256x256xf32>, vector<1x256xf32> -> vector<1x256xf32>
    %c0_60 = arith.constant 0 : index
    %c0_61 = arith.constant 0 : index
    %c0_62 = arith.constant 0 : index
    %74 = vector.load %arg6[%c0_60, %c0_61, %c0_62] : memref<1x1x256xf32, #tpu.memory_space<vmem>>, vector<1x1x256xf32>
    %75 = vector.shape_cast %74 : vector<1x1x256xf32> to vector<1x256xf32>
    %76 = vector.shape_cast %73 : vector<1x256xf32> to vector<1x1x256xf32>
    tpu.vector_store %arg6[%c0_60, %c0_61, %c0_62], %76 {strides = array<i32>} : memref<1x1x256xf32, #tpu.memory_space<vmem>>, vector<1x1x256xf32>,
    return
  }
  func.func @transform_0(%arg0: i32) -> (i32, i32, i32) {
    %c0_i32 = arith.constant 0 : i32
    %c0_i32_0 = arith.constant 0 : i32
    %c0_i32_1 = arith.constant 0 : i32
    return %arg0, %c0_i32, %c0_i32_0 : i32, i32, i32
  }
  func.func @transform_1(%arg0: i32) -> (i32, i32) {
    %c0_i32 = arith.constant 0 : i32
    %c0_i32_0 = arith.constant 0 : i32
    %c0_i32_1 = arith.constant 0 : i32
    return %c0_i32, %c0_i32_0 : i32, i32
  }
  func.func @transform_2(%arg0: i32) -> (i32, i32) {
    %c0_i32 = arith.constant 0 : i32
    %c0_i32_0 = arith.constant 0 : i32
    %c0_i32_1 = arith.constant 0 : i32
    return %c0_i32, %c0_i32_0 : i32, i32
  }
  func.func @transform_3(%arg0: i32) -> (i32, i32) {
    %c0_i32 = arith.constant 0 : i32
    %c0_i32_0 = arith.constant 0 : i32
    %c0_i32_1 = arith.constant 0 : i32
    return %c0_i32, %c0_i32_0 : i32, i32
  }
  func.func @transform_4(%arg0: i32) -> (i32, i32, i32) {
    %c0_i32 = arith.constant 0 : i32
    %c0_i32_0 = arith.constant 0 : i32
    %c0_i32_1 = arith.constant 0 : i32
    return %arg0, %c0_i32, %c0_i32_0 : i32, i32, i32
  }
  func.func @transform_5(%arg0: i32) -> (i32, i32, i32) {
    %c0_i32 = arith.constant 0 : i32
    %c0_i32_0 = arith.constant 0 : i32
    %c0_i32_1 = arith.constant 0 : i32
    return %arg0, %c0_i32, %c0_i32_0 : i32, i32, i32
  }
}

</mosaic_0001>

<llo_original>
// kernel: tpu_custom_call.1
$region0: #{tpu_custom_call.1}
  #allocation0 [shape = 'u32[]', space=smem, size = 0x4, offset = 0x4, fixed_abs, tag = 'smem constant byte address 0x4 - core index']
  #allocation1 [shape = 'u32[72,128]{1,0:T(1,128)}', space=vmem, size = 0x9000, scoped, tag = 'internal scratch']
  #allocation2 [shape = 'f32[12,16]{1,0:T(8,128)}', space=vmem, size = 0x2000, scoped, tag = 'scratch operand']
  #allocation3 [shape = 'f32[24,16]{1,0:T(8,128)}', space=vmem, size = 0x3000, scoped, tag = 'scratch operand']
  #allocation4 [shape = 'f32[1,256]{1,0:T(1,128)}', space=vmem, size = 0x400, scoped, tag = 'scratch operand']
  %s0 = inlined_call_operand.hbm [shape: f32[2,4,16], index: 0, kind: input, shape index: {}]
  %s1 = inlined_call_operand.hbm [shape: f32[8,12], index: 1, kind: input, shape index: {}]
  %s2 = inlined_call_operand.hbm [shape: f32[16,24], index: 2, kind: input, shape index: {}]
  %s3 = inlined_call_operand.hbm [shape: f32[256,256], index: 3, kind: input, shape index: {}]
  %s4 = inlined_call_operand.hbm [shape: f32[2,16,16], index: 4, kind: output, shape index: {0}]
  %s5 = inlined_call_operand.hbm [shape: f32[2,1,256], index: 5, kind: output, shape index: {1}]
  %6 = xla_tuple %s4, %s5
  %s7 = sld [smem:[#allocation0]]
  $region73: #{tpu_custom_call.1} parent=0
    _
  %s9 = ssub.s32 1, %s7
  %s10 = scalar_select 0, %s9, %s7
  $region1: #{tpu_custom_call.1} parent=0
    #allocation5 [shape = 'u8[4096]{0}', space=vmem, size = 0x1000, scoped, tag = 'input window, operand 0']
    #allocation6 [shape = 's32[2]{0}', space=sflag, size = 0x8, scoped, tag = 'scoped memory for tpu_custom_call.1']
    #allocation7 [shape = 's32[2]{0}', space=sflag, size = 0x8, scoped, tag = 'scoped memory for tpu_custom_call.1']
    #allocation8 [shape = 'u8[4096]{0}', space=vmem, size = 0x1000, scoped, tag = 'input window, operand 1, single buffered']
    #allocation9 [shape = 's32[1]{0}', space=sflag, size = 0x4, scoped, tag = 'scoped memory for tpu_custom_call.1']
    #allocation10 [shape = 'u8[8192]{0}', space=vmem, size = 0x2000, scoped, tag = 'input window, operand 2, single buffered']
    #allocation11 [shape = 'u8[262144]{0}', space=vmem, size = 0x40000, scoped, tag = 'input window, operand 3, single buffered']
    #allocation12 [shape = 's32[1]{0}', space=sflag, size = 0x4, scoped, tag = 'scoped memory for tpu_custom_call.1']
    #allocation13 [shape = 'u8[16384]{0}', space=vmem, size = 0x4000, scoped, tag = 'output window, operand 0']
    #allocation14 [shape = 'u8[2048]{0}', space=vmem, size = 0x800, scoped, tag = 'output window, operand 1']
    #allocation15 [shape = 's32[2]{0}', space=sflag, size = 0x8, scoped, tag = 'scoped memory for tpu_custom_call.1']
    %11 = vsyncpa [#allocation6], 0
    %s12 = scalar_lea.sflag [#allocation6], 1
    %13 = vsyncpa %s12, 0
    %14 = vsyncpa [#allocation9], 0
    %15 = vsyncpa [#allocation12], 0
    %16 = vsyncpa [#allocation7], 0
    %s17 = scalar_lea.sflag [#allocation7], 1
    %18 = vsyncpa %s17, 0
    %19 = vsyncpa [#allocation15], 0
    %s20 = scalar_lea.sflag [#allocation15], 1
    %21 = vsyncpa %s20, 0
    loop: start=0, step=1, limit=4
    $region2: #{tpu_custom_call.1} parent=1 // loop_pre_header
      _
    $region3: #{tpu_custom_call.1} parent=1 // loop_header
      %s23 = sphi 0, %s27
      %p24 = scmp.ge.s32.totalorder %s23, 4
      %s33 = sphi 0, %s35
      %s36 = sphi 0, %s33
      %s37 = sphi 0, %s36
      %s53 = sphi 0, %s37
      %s57 = sphi 0, %s57
      %s59 = sphi 0, %s57
      %s60 = sphi 0, %s59
      %s74 = sphi 0, %s60
      %s78 = sphi 0, %s78
      %s80 = sphi 0, %s78
      %s81 = sphi 0, %s80
      %s95 = sphi 0, %s81
      %s99 = sphi 0, %s99
      %s101 = sphi 0, %s99
      %s102 = sphi 0, %s101
      %s116 = sphi 0, %s102
      %s122 = sphi 0, %s124
      %s125 = sphi 0, %s122
      %s126 = sphi 0, %s125
      %s142 = sphi 0, %s126
      %s148 = sphi 0, %s150
      %s151 = sphi 0, %s148
      %s152 = sphi 0, %s151
      %s168 = sphi 0, %s152
    $region4: #{tpu_custom_call.1} parent=1 // loop_header_branch
      %26 = sbr.rel (%p24) target = $region8
    $region5: #{tpu_custom_call.1} parent=1 // loop_body
      %s28 = ssub.s32 %s23, 1
      %s29 = ssub.s32 %s23, 2
      %s30 = sadd.s32 %s23, 1
      %s31 = ssub.s32 %s23, %s30
      %p32 = scmp.eq.s32.totalorder %s31, 0
      %s34 = sadd.s32 %s33, 1
      %s35 = scalar_select %p32, %s33, %s34
      %p38 = pneg %p32
      %p39 = scmp.eq.s32.totalorder %s23, 1
      %p40 = por %p38, %p39
      %p41 = scmp.ne.s32.totalorder %s33, %s36
      %p42 = scmp.eq.s32.totalorder %s23, 0
      %p43 = por %p41, %p42
      %p44 = scmp.ne.s32.totalorder %s33, %s36
      %p45 = scmp.eq.s32.totalorder %s28, 1
      %p46 = por %p44, %p45
      %p47 = scmp.ne.s32.totalorder %s36, %s37
      %p48 = scmp.eq.s32.totalorder %s28, 0
      %p49 = por %p47, %p48
      %p50 = scmp.ne.s32.totalorder %s36, %s37
      %p51 = scmp.eq.s32.totalorder %s29, 1
      %p52 = por %p50, %p51
      %p54 = scmp.ne.s32.totalorder %s37, %s53
      %p55 = scmp.eq.s32.totalorder %s29, 0
      %p56 = por %p54, %p55
      %s58 = sadd.s32 %s57, 1
      %p61 = scmp.eq.s32.totalorder %s23, 1
      %p62 = scmp.ne.s32.totalorder %s57, %s59
      %p63 = scmp.eq.s32.totalorder %s23, 0
      %p64 = por %p62, %p63
      %p65 = scmp.ne.s32.totalorder %s57, %s59
      %p66 = scmp.eq.s32.totalorder %s28, 1
      %p67 = por %p65, %p66
      %p68 = scmp.ne.s32.totalorder %s59, %s60
      %p69 = scmp.eq.s32.totalorder %s28, 0
      %p70 = por %p68, %p69
      %p71 = scmp.ne.s32.totalorder %s59, %s60
      %p72 = scmp.eq.s32.totalorder %s29, 1
      %p73 = por %p71, %p72
      %p75 = scmp.ne.s32.totalorder %s60, %s74
      %p76 = scmp.eq.s32.totalorder %s29, 0
      %p77 = por %p75, %p76
      %s79 = sadd.s32 %s78, 1
      %p82 = scmp.eq.s32.totalorder %s23, 1
      %p83 = scmp.ne.s32.totalorder %s78, %s80
      %p84 = scmp.eq.s32.totalorder %s23, 0
      %p85 = por %p83, %p84
      %p86 = scmp.ne.s32.totalorder %s78, %s80
      %p87 = scmp.eq.s32.totalorder %s28, 1
      %p88 = por %p86, %p87
      %p89 = scmp.ne.s32.totalorder %s80, %s81
      %p90 = scmp.eq.s32.totalorder %s28, 0
      %p91 = por %p89, %p90
      %p92 = scmp.ne.s32.totalorder %s80, %s81
      %p93 = scmp.eq.s32.totalorder %s29, 1
      %p94 = por %p92, %p93
      %p96 = scmp.ne.s32.totalorder %s81, %s95
      %p97 = scmp.eq.s32.totalorder %s29, 0
      %p98 = por %p96, %p97
      %s100 = sadd.s32 %s99, 1
      %p103 = scmp.eq.s32.totalorder %s23, 1
      %p104 = scmp.ne.s32.totalorder %s99, %s101
      %p105 = scmp.eq.s32.totalorder %s23, 0
      %p106 = por %p104, %p105
      %p107 = scmp.ne.s32.totalorder %s99, %s101
      %p108 = scmp.eq.s32.totalorder %s28, 1
      %p109 = por %p107, %p108
      %p110 = scmp.ne.s32.totalorder %s101, %s102
      %p111 = scmp.eq.s32.totalorder %s28, 0
      %p112 = por %p110, %p111
      %p113 = scmp.ne.s32.totalorder %s101, %s102
      %p114 = scmp.eq.s32.totalorder %s29, 1
      %p115 = por %p113, %p114
      %p117 = scmp.ne.s32.totalorder %s102, %s116
      %p118 = scmp.eq.s32.totalorder %s29, 0
      %p119 = por %p117, %p118
      %s120 = ssub.s32 %s23, %s30
      %p121 = scmp.eq.s32.totalorder %s120, 0
      %s123 = sadd.s32 %s122, 1
      %s124 = scalar_select %p121, %s122, %s123
      %p127 = pneg %p121
      %p128 = scmp.eq.s32.totalorder %s23, 1
      %p129 = por %p127, %p128
      %p130 = scmp.ne.s32.totalorder %s122, %s125
      %p131 = scmp.eq.s32.totalorder %s23, 0
      %p132 = por %p130, %p131
      %p133 = scmp.ne.s32.totalorder %s122, %s125
      %p134 = scmp.eq.s32.totalorder %s28, 1
      %p135 = por %p133, %p134
      %p136 = scmp.ne.s32.totalorder %s125, %s126
      %p137 = scmp.eq.s32.totalorder %s28, 0
      %p138 = por %p136, %p137
      %p139 = scmp.ne.s32.totalorder %s125, %s126
      %p140 = scmp.eq.s32.totalorder %s29, 1
      %p141 = por %p139, %p140
      %p143 = scmp.ne.s32.totalorder %s126, %s142
      %p144 = scmp.eq.s32.totalorder %s29, 0
      %p145 = por %p143, %p144
      %s146 = ssub.s32 %s23, %s30
      %p147 = scmp.eq.s32.totalorder %s146, 0
      %s149 = sadd.s32 %s148, 1
      %s150 = scalar_select %p147, %s148, %s149
      %p153 = pneg %p147
      %p154 = scmp.eq.s32.totalorder %s23, 1
      %p155 = por %p153, %p154
      %p156 = scmp.ne.s32.totalorder %s148, %s151
      %p157 = scmp.eq.s32.totalorder %s23, 0
      %p158 = por %p156, %p157
      %p159 = scmp.ne.s32.totalorder %s148, %s151
      %p160 = scmp.eq.s32.totalorder %s28, 1
      %p161 = por %p159, %p160
      %p162 = scmp.ne.s32.totalorder %s151, %s152
      %p163 = scmp.eq.s32.totalorder %s28, 0
      %p164 = por %p162, %p163
      %p165 = scmp.ne.s32.totalorder %s151, %s152
      %p166 = scmp.eq.s32.totalorder %s29, 1
      %p167 = por %p165, %p166
      %p169 = scmp.ne.s32.totalorder %s152, %s168
      %p170 = scmp.eq.s32.totalorder %s29, 0
      %p171 = por %p169, %p170
      %p172 = scmp.le.s32.totalorder 1, %s23
      %p173 = scmp.lt.s32.totalorder %s23, 3
      %p174 = pnand %p172, %p173
      %p175 = pneg %p174
      // Predicated region
      $region9: #{tpu_custom_call.1} parent=5 // pred_check
        _
      $region10: #{tpu_custom_call.1} parent=5 // pred_check_branch
        %177 = sbr.rel (%p174) target = $region12
      $region11: #{tpu_custom_call.1} parent=5 // pred_region
        %s178 = ssub.s32 %s23, 1
        // Predicated region
        $region13: #{tpu_custom_call.1} parent=11 // pred_check
          %p179 = pneg %p70
        $region14: #{tpu_custom_call.1} parent=11 // pred_check_branch
          %181 = sbr.rel (%p179) target = $region16
        $region15: #{tpu_custom_call.1} parent=11 // pred_region
          %183 = vsyncadd [#allocation9], 0
          %s185 = sshll.u32 %s1, 4
          %s186 = int_to_ptr.hbm [resolvable:$true] %s185
          %s187 = sshll.u32 [#allocation8], 4
          %s188 = int_to_ptr.vmem [resolvable:$true] %s187
          %190 = dma.hbm_to_vmem [thread:$0]  %s186, 128, %s188, [#allocation9]
        $region16: #{tpu_custom_call.1} parent=11 // pred_fallthru
          _
        // Predicated region
        $region17: #{tpu_custom_call.1} parent=11 // pred_check
          %p191 = pneg %p91
        $region18: #{tpu_custom_call.1} parent=11 // pred_check_branch
          %193 = sbr.rel (%p191) target = $region20
        $region19: #{tpu_custom_call.1} parent=11 // pred_region
          %195 = vsyncadd [#allocation9], 0
          %s196 = sshll.u32 %s2, 4
          %s197 = int_to_ptr.hbm [resolvable:$true] %s196
          %s198 = sshll.u32 [#allocation10], 4
          %s199 = int_to_ptr.vmem [resolvable:$true] %s198
          %204 = dma.hbm_to_vmem [thread:$0]  %s197, 256, %s199, [#allocation9], 128, 128, 8
        $region20: #{tpu_custom_call.1} parent=11 // pred_fallthru
          _
        // Predicated region
        $region21: #{tpu_custom_call.1} parent=11 // pred_check
          %p205 = pneg %p112
        $region22: #{tpu_custom_call.1} parent=11 // pred_check_branch
          %207 = sbr.rel (%p205) target = $region24
        $region23: #{tpu_custom_call.1} parent=11 // pred_region
          %209 = vsyncadd [#allocation12], 0
          %s210 = sshll.u32 %s3, 4
          %s211 = int_to_ptr.hbm [resolvable:$true] %s210
          %s212 = sshll.u32 [#allocation11], 4
          %s213 = int_to_ptr.vmem [resolvable:$true] %s212
          %218 = dma.hbm_to_vmem [thread:$0]  %s211, 8192, %s213, [#allocation12], 256, 256, 16
        $region24: #{tpu_custom_call.1} parent=11 // pred_fallthru
          _
      $region12: #{tpu_custom_call.1} parent=5 // pred_fallthru
        _
      %p219 = scmp.lt.s32.totalorder %s23, 2
      // Predicated region
      $region25: #{tpu_custom_call.1} parent=5 // pred_check
        %p220 = pneg %p219
      $region26: #{tpu_custom_call.1} parent=5 // pred_check_branch
        %222 = sbr.rel (%p220) target = $region28
      $region27: #{tpu_custom_call.1} parent=5 // pred_region
        // Predicated region
        $region29: #{tpu_custom_call.1} parent=27 // pred_check
          %p223 = pneg %p43
        $region30: #{tpu_custom_call.1} parent=27 // pred_check_branch
          %225 = sbr.rel (%p223) target = $region32
        $region31: #{tpu_custom_call.1} parent=27 // pred_region
          %s226 = sand.u32 %s33, 1
          %s227 = scalar_lea.sflag [#allocation6], %s226
          %s228 = sand.u32 %s33, 1
          %s229 = smul.addr %s228, 4
          %s230 = scalar_lea.vmem [#allocation5], %s229
          %232 = vsyncadd %s227, 0
          %s233 = smul.addr %s23, 4
          %s234 = scalar_lea.hbm %s0, %s233
          %s236 = sshll.u32 %s234, 4
          %s237 = int_to_ptr.hbm [resolvable:$true] %s236
          %s238 = sshll.u32 %s230, 4
          %s239 = int_to_ptr.vmem [resolvable:$true] %s238
          %241 = dma.hbm_to_vmem [thread:$0]  %s237, 64, %s239, %s227
        $region32: #{tpu_custom_call.1} parent=27 // pred_fallthru
          _
      $region28: #{tpu_custom_call.1} parent=5 // pred_fallthru
        _
      %p242 = scmp.le.s32.totalorder 1, %s23
      %p243 = scmp.lt.s32.totalorder %s23, 3
      %p244 = pnand %p242, %p243
      %p245 = pneg %p244
      // Predicated region
      $region33: #{tpu_custom_call.1} parent=5 // pred_check
        _
      $region34: #{tpu_custom_call.1} parent=5 // pred_check_branch
        %247 = sbr.rel (%p244) target = $region36
      $region35: #{tpu_custom_call.1} parent=5 // pred_region
        %s248 = ssub.s32 %s23, 1
        %s249 = sand.u32 %s36, 1
        %s250 = scalar_lea.sflag [#allocation6], %s249
        %s251 = sand.u32 %s36, 1
        %s252 = smul.addr %s251, 4
        %s253 = scalar_lea.vmem [#allocation5], %s252
        // Predicated region
        $region37: #{tpu_custom_call.1} parent=35 // pred_check
          %p254 = pneg %p49
        $region38: #{tpu_custom_call.1} parent=35 // pred_check_branch
          %256 = sbr.rel (%p254) target = $region40
        $region39: #{tpu_custom_call.1} parent=35 // pred_region
          %258 = dma.done %s250, 64
        $region40: #{tpu_custom_call.1} parent=35 // pred_fallthru
          _
        // Predicated region
        $region41: #{tpu_custom_call.1} parent=35 // pred_check
          %p259 = pneg %p70
        $region42: #{tpu_custom_call.1} parent=35 // pred_check_branch
          %261 = sbr.rel (%p259) target = $region44
        $region43: #{tpu_custom_call.1} parent=35 // pred_region
          %263 = dma.done [#allocation9], 128
        $region44: #{tpu_custom_call.1} parent=35 // pred_fallthru
          _
        // Predicated region
        $region45: #{tpu_custom_call.1} parent=35 // pred_check
          %p264 = pneg %p91
        $region46: #{tpu_custom_call.1} parent=35 // pred_check_branch
          %266 = sbr.rel (%p264) target = $region48
        $region47: #{tpu_custom_call.1} parent=35 // pred_region
          %268 = dma.done [#allocation9], 256
        $region48: #{tpu_custom_call.1} parent=35 // pred_fallthru
          _
        // Predicated region
        $region49: #{tpu_custom_call.1} parent=35 // pred_check
          %p269 = pneg %p112
        $region50: #{tpu_custom_call.1} parent=35 // pred_check_branch
          %271 = sbr.rel (%p269) target = $region52
        $region51: #{tpu_custom_call.1} parent=35 // pred_region
          %273 = dma.done [#allocation12], 8192
        $region52: #{tpu_custom_call.1} parent=35 // pred_fallthru
          _
        %s274 = sand.u32 %s36, 1
        %s275 = scalar_lea.sflag [#allocation6], %s274
        %s276 = sand.u32 %s36, 1
        %s277 = smul.addr %s276, 4
        %s278 = scalar_lea.vmem [#allocation5], %s277
        %p279 = pneg %p49
        %p280 = pneg %p46
        %p281 = pneg %p70
        %p282 = pneg %p67
        %p283 = pneg %p91
        %p284 = pneg %p88
        %p285 = pneg %p112
        %p286 = pneg %p109
        %p287 = pneg %p138
        %p288 = pneg %p135
        %s289 = sand.u32 %s125, 1
        %s290 = scalar_lea.sflag [#allocation7], %s289
        %s291 = sand.u32 %s125, 1
        %s292 = smul.addr %s291, 16
        %s293 = scalar_lea.vmem [#allocation13], %s292
        %p294 = pneg %p164
        %p295 = pneg %p161
        %s296 = sand.u32 %s151, 1
        %s297 = scalar_lea.sflag [#allocation15], %s296
        %s298 = sand.u32 %s151, 1
        %s299 = smul.addr %s298, 2
        %s300 = scalar_lea.vmem [#allocation14], %s299
        %v301 = vld [vmem:[%s253] sm:$0xf]
        %303 = vrot.lane.b32.xlu0 %v301, 1
        %v304 = vpop.permute.xlu0 %303
        %vm306 = vcmask 125960
        %307 = vst.msk [vmem:[#allocation2] sm:$0xf] %vm306, %v304
        %vm308 = vcmask 3072
        %309 = vst.msk [vmem:[#allocation2] sm:$0xf] %vm308, 0.0
        %vm310 = vcmask 125952
        %311 = vst.msk [vmem:[#allocation2 + $0x4] sm:$0xf] %vm310, %v301
        %312 = vrot.lane.b32.xlu0 %v301, 127
        %v313 = vpop.permute.xlu0 %312
        %vm315 = vcmask 117760
        %316 = vst.msk [vmem:[#allocation2 + $0x8] sm:$0xf] %vm315, %v313
        %vm317 = vcmask 126072
        %318 = vst.msk [vmem:[#allocation2 + $0x8] sm:$0xf] %vm317, 0.0
        %v319 = vld [vmem:[#allocation8] sm:$0xff]
        %v320 = vld [vmem:[#allocation2] sm:$0xff]
        %v321 = vld [vmem:[#allocation2 + $0x8] sm:$0xf]
        %vm322 = vcmask 97280
        %v324 = vsel %vm322, %v319, 0
        %vm326 = vcmask 1043456
        %v328 = vsel %vm326, %v321, 0
        %330 = vmatpush.msra.mxu0 0.0
        %331 = vmatpush.msra.mxu0 0.0
        %332 = vmatpush.msra.mxu0 0.0
        %333 = vmatpush.msra.mxu0 0.0
        %334 = vmatpush.msra.mxu0 0.0
        %335 = vmatpush.msra.mxu0 0.0
        %336 = vmatpush.msra.mxu0 0.0
        %337 = vmatpush.msra.mxu0 0.0
        %338 = vmatpush.msra.mxu0 0.0
        %339 = vmatpush.msra.mxu0 0.0
        %340 = vmatpush.msra.mxu0 0.0
        %341 = vmatpush.msra.mxu0 0.0
        %342 = vmatpush.msra.mxu0 0.0
        %343 = vmatpush.msra.mxu0 0.0
        %344 = vmatpush.msra.mxu0 %v328
        %345 = vmatpush.msra.mxu0 %v320
        %346 = vmatmul.f32.gmra.mxu0 %v324
        %v347 = vpop.f32.mrf.mxu0
        %v348 = vadd.f32 0.0, %v347
        %349 = vdwg.mxu0
        %vm350 = vcmp.gt.f32.partialorder %v348, 0.0
        %v351 = vmul.f32 %v348, 1.442695
        %v352 = vpow.pop %v351
        %v353 = vsub.f32 %v352, 1.0
        %v354 = vmul.f32 %v353, 1.6732632
        %v355 = vsel %vm350, %v348, %v354
        %v356 = vmul.f32 %v355, 1.050701
        %358 = vrot.lane.b32.xlu0 %v356, 1
        %v359 = vpop.permute.xlu0 %358
        %vm361 = vcmask 130056
        %362 = vst.msk [vmem:[#allocation3] sm:$0xff] %vm361, %v359
        %vm363 = vcmask 7168
        %364 = vst.msk [vmem:[#allocation3] sm:$0xff] %vm363, 0.0
        %vm365 = vcmask 130048
        %366 = vst.msk [vmem:[#allocation3 + $0x8] sm:$0xff] %vm365, %v356
        %367 = vrot.lane.b32.xlu0 %v356, 127
        %v368 = vpop.permute.xlu0 %367
        %vm370 = vcmask 121856
        %371 = vst.msk [vmem:[#allocation3 + $0x10] sm:$0xff] %vm370, %v368
        %vm372 = vcmask 130168
        %373 = vst.msk [vmem:[#allocation3 + $0x10] sm:$0xff] %vm372, 0.0
        %v374 = vld [vmem:[#allocation10] sm:$0xff]
        %v375 = vld [vmem:[#allocation10 + $0x8] sm:$0xff]
        %v376 = vld [vmem:[#allocation3] sm:$0xff]
        %v377 = vld [vmem:[#allocation3 + $0x8] sm:$0xff]
        %v378 = vld [vmem:[#allocation3 + $0x10] sm:$0xff]
        %vm379 = vcmask 195584
        %v381 = vsel %vm379, %v374, 0
        %v384 = vsel %vm379, %v375, 0
        %386 = vmatpush.msra.mxu0 0.0
        %387 = vmatpush.msra.mxu0 0.0
        %388 = vmatpush.msra.mxu0 0.0
        %389 = vmatpush.msra.mxu0 0.0
        %390 = vmatpush.msra.mxu0 0.0
        %391 = vmatpush.msra.mxu0 0.0
        %392 = vmatpush.msra.mxu0 0.0
        %393 = vmatpush.msra.mxu0 0.0
        %394 = vmatpush.msra.mxu0 0.0
        %395 = vmatpush.msra.mxu0 0.0
        %396 = vmatpush.msra.mxu0 0.0
        %397 = vmatpush.msra.mxu0 0.0
        %398 = vmatpush.msra.mxu0 0.0
        %399 = vmatpush.msra.mxu0 %v378
        %400 = vmatpush.msra.mxu0 %v377
        %401 = vmatpush.msra.mxu0 %v376
        %402 = vmatmul.f32.gmra.mxu0 %v381
        %v403 = vpop.f32.mrf.mxu0
        %v404 = vadd.f32 0.0, %v403
        %405 = vmatmul.f32.gmra.mxu0 %v384
        %v406 = vpop.f32.mrf.mxu0
        %v407 = vadd.f32 0.0, %v406
        %408 = vdwg.mxu0
        %409 = vst.msk [vmem:[%s293] sm:$0xff] %vm365, %v404
        %410 = vst.msk [vmem:[%s293 + $0x8] sm:$0xff] %vm365, %v407
        %v411 = vlaneseq
        %vm412 = vcmp.ge.s32.totalorder %v411, 0
        %vm413 = vcmp.lt.s32.totalorder %v411, 16
        %vm414 = vmand %vm412, %vm413
        %415 = vst.msk [vmem:[#allocation4] sm:$0x1] %vm414, %v404
        %417 = vst [vmem:[#allocation1] sm:$0xff] %v404
        %s418 = scalar_lea.vmem [#allocation1], 1
        %v419 = vld [vmem:[%s418] ss:$9 sm:$0xff]
        %420 = vrot.lane.b32.xlu0 %v419, 16
        %v421 = vpop.permute.xlu0 %420
        %vm423 = vcmp.ge.s32.totalorder %v411, 16
        %vm424 = vcmp.lt.s32.totalorder %v411, 32
        %vm425 = vmand %vm423, %vm424
        %426 = vst.msk [vmem:[#allocation4] sm:$0x1] %vm425, %v421
        %427 = vst [vmem:[#allocation1] sm:$0xff] %v404
        %s428 = scalar_lea.vmem [#allocation1], 2
        %v429 = vld [vmem:[%s428] ss:$9 sm:$0xff]
        %430 = vrot.lane.b32.xlu0 %v429, 32
        %v431 = vpop.permute.xlu0 %430
        %vm433 = vcmp.ge.s32.totalorder %v411, 32
        %vm434 = vcmp.lt.s32.totalorder %v411, 48
        %vm435 = vmand %vm433, %vm434
        %436 = vst.msk [vmem:[#allocation4] sm:$0x1] %vm435, %v431
        %437 = vst [vmem:[#allocation1] sm:$0xff] %v404
        %s438 = scalar_lea.vmem [#allocation1], 3
        %v439 = vld [vmem:[%s438] ss:$9 sm:$0xff]
        %440 = vrot.lane.b32.xlu0 %v439, 48
        %v441 = vpop.permute.xlu0 %440
        %vm443 = vcmp.ge.s32.totalorder %v411, 48
        %vm444 = vcmp.lt.s32.totalorder %v411, 64
        %vm445 = vmand %vm443, %vm444
        %446 = vst.msk [vmem:[#allocation4] sm:$0x1] %vm445, %v441
        %447 = vst [vmem:[#allocation1] sm:$0xff] %v404
        %s448 = scalar_lea.vmem [#allocation1], 4
        %v449 = vld [vmem:[%s448] ss:$9 sm:$0xff]
        %450 = vrot.lane.b32.xlu0 %v449, 64
        %v451 = vpop.permute.xlu0 %450
        %vm453 = vcmp.ge.s32.totalorder %v411, 64
        %vm454 = vcmp.lt.s32.totalorder %v411, 80
        %vm455 = vmand %vm453, %vm454
        %456 = vst.msk [vmem:[#allocation4] sm:$0x1] %vm455, %v451
        %457 = vst [vmem:[#allocation1] sm:$0xff] %v404
        %s458 = scalar_lea.vmem [#allocation1], 5
        %v459 = vld [vmem:[%s458] ss:$9 sm:$0xff]
        %460 = vrot.lane.b32.xlu0 %v459, 80
        %v461 = vpop.permute.xlu0 %460
        %vm463 = vcmp.ge.s32.totalorder %v411, 80
        %vm464 = vcmp.lt.s32.totalorder %v411, 96
        %vm465 = vmand %vm463, %vm464
        %466 = vst.msk [vmem:[#allocation4] sm:$0x1] %vm465, %v461
        %467 = vst [vmem:[#allocation1] sm:$0xff] %v404
        %s468 = scalar_lea.vmem [#allocation1], 6
        %v469 = vld [vmem:[%s468] ss:$9 sm:$0xff]
        %470 = vrot.lane.b32.xlu0 %v469, 96
        %v471 = vpop.permute.xlu0 %470
        %vm473 = vcmp.ge.s32.totalorder %v411, 96
        %vm474 = vcmp.lt.s32.totalorder %v411, 112
        %vm475 = vmand %vm473, %vm474
        %476 = vst.msk [vmem:[#allocation4] sm:$0x1] %vm475, %v471
        %477 = vst [vmem:[#allocation1] sm:$0xff] %v404
        %s478 = scalar_lea.vmem [#allocation1], 7
        %v479 = vld [vmem:[%s478] ss:$9 sm:$0xff]
        %480 = vrot.lane.b32.xlu0 %v479, 112
        %v481 = vpop.permute.xlu0 %480
        %vm483 = vcmp.ge.s32.totalorder %v411, 112
        %vm484 = vcmp.lt.s32.totalorder %v411, 128
        %vm485 = vmand %vm483, %vm484
        %486 = vst.msk [vmem:[#allocation4] sm:$0x1] %vm485, %v481
        %487 = vst.msk [vmem:[#allocation4 + $0x1] sm:$0x1] %vm414, %v407
        %489 = vst [vmem:[#allocation1] sm:$0xff] %v407
        %s490 = scalar_lea.vmem [#allocation1], 1
        %v491 = vld [vmem:[%s490] ss:$9 sm:$0xff]
        %492 = vrot.lane.b32.xlu0 %v491, 16
        %v493 = vpop.permute.xlu0 %492
        %495 = vst.msk [vmem:[#allocation4 + $0x1] sm:$0x1] %vm425, %v493
        %496 = vst [vmem:[#allocation1] sm:$0xff] %v407
        %s497 = scalar_lea.vmem [#allocation1], 2
        %v498 = vld [vmem:[%s497] ss:$9 sm:$0xff]
        %499 = vrot.lane.b32.xlu0 %v498, 32
        %v500 = vpop.permute.xlu0 %499
        %502 = vst.msk [vmem:[#allocation4 + $0x1] sm:$0x1] %vm435, %v500
        %503 = vst [vmem:[#allocation1] sm:$0xff] %v407
        %s504 = scalar_lea.vmem [#allocation1], 3
        %v505 = vld [vmem:[%s504] ss:$9 sm:$0xff]
        %506 = vrot.lane.b32.xlu0 %v505, 48
        %v507 = vpop.permute.xlu0 %506
        %509 = vst.msk [vmem:[#allocation4 + $0x1] sm:$0x1] %vm445, %v507
        %510 = vst [vmem:[#allocation1] sm:$0xff] %v407
        %s511 = scalar_lea.vmem [#allocation1], 4
        %v512 = vld [vmem:[%s511] ss:$9 sm:$0xff]
        %513 = vrot.lane.b32.xlu0 %v512, 64
        %v514 = vpop.permute.xlu0 %513
        %516 = vst.msk [vmem:[#allocation4 + $0x1] sm:$0x1] %vm455, %v514
        %517 = vst [vmem:[#allocation1] sm:$0xff] %v407
        %s518 = scalar_lea.vmem [#allocation1], 5
        %v519 = vld [vmem:[%s518] ss:$9 sm:$0xff]
        %520 = vrot.lane.b32.xlu0 %v519, 80
        %v521 = vpop.permute.xlu0 %520
        %523 = vst.msk [vmem:[#allocation4 + $0x1] sm:$0x1] %vm465, %v521
        %524 = vst [vmem:[#allocation1] sm:$0xff] %v407
        %s525 = scalar_lea.vmem [#allocation1], 6
        %v526 = vld [vmem:[%s525] ss:$9 sm:$0xff]
        %527 = vrot.lane.b32.xlu0 %v526, 96
        %v528 = vpop.permute.xlu0 %527
        %530 = vst.msk [vmem:[#allocation4 + $0x1] sm:$0x1] %vm475, %v528
        %531 = vst [vmem:[#allocation1] sm:$0xff] %v407
        %s532 = scalar_lea.vmem [#allocation1], 7
        %v533 = vld [vmem:[%s532] ss:$9 sm:$0xff]
        %534 = vrot.lane.b32.xlu0 %v533, 112
        %v535 = vpop.permute.xlu0 %534
        %537 = vst.msk [vmem:[#allocation4 + $0x1] sm:$0x1] %vm485, %v535
        %v538 = vld [vmem:[#allocation4] sm:$0x3]
        %v539 = vld [vmem:[#allocation11] sm:$0xff]
        %v540 = vld [vmem:[#allocation11 + $0x8] sm:$0xff]
        %v541 = vld [vmem:[#allocation11 + $0x10] sm:$0xff]
        %v542 = vld [vmem:[#allocation11 + $0x18] sm:$0xff]
        %v543 = vld [vmem:[#allocation11 + $0x20] sm:$0xff]
        %v544 = vld [vmem:[#allocation11 + $0x28] sm:$0xff]
        %v545 = vld [vmem:[#allocation11 + $0x30] sm:$0xff]
        %v546 = vld [vmem:[#allocation11 + $0x38] sm:$0xff]
        %v547 = vld [vmem:[#allocation11 + $0x40] sm:$0xff]
        %v548 = vld [vmem:[#allocation11 + $0x48] sm:$0xff]
        %v549 = vld [vmem:[#allocation11 + $0x50] sm:$0xff]
        %v550 = vld [vmem:[#allocation11 + $0x58] sm:$0xff]
        %v551 = vld [vmem:[#allocation11 + $0x60] sm:$0xff]
        %v552 = vld [vmem:[#allocation11 + $0x68] sm:$0xff]
        %v553 = vld [vmem:[#allocation11 + $0x70] sm:$0xff]
        %v554 = vld [vmem:[#allocation11 + $0x78] sm:$0xff]
        %v555 = vld [vmem:[#allocation11 + $0x80] sm:$0xff]
        %v556 = vld [vmem:[#allocation11 + $0x88] sm:$0xff]
        %v557 = vld [vmem:[#allocation11 + $0x90] sm:$0xff]
        %v558 = vld [vmem:[#allocation11 + $0x98] sm:$0xff]
        %v559 = vld [vmem:[#allocation11 + $0xa0] sm:$0xff]
        %v560 = vld [vmem:[#allocation11 + $0xa8] sm:$0xff]
        %v561 = vld [vmem:[#allocation11 + $0xb0] sm:$0xff]
        %v562 = vld [vmem:[#allocation11 + $0xb8] sm:$0xff]
        %v563 = vld [vmem:[#allocation11 + $0xc0] sm:$0xff]
        %v564 = vld [vmem:[#allocation11 + $0xc8] sm:$0xff]
        %v565 = vld [vmem:[#allocation11 + $0xd0] sm:$0xff]
        %v566 = vld [vmem:[#allocation11 + $0xd8] sm:$0xff]
        %v567 = vld [vmem:[#allocation11 + $0xe0] sm:$0xff]
        %v568 = vld [vmem:[#allocation11 + $0xe8] sm:$0xff]
        %v569 = vld [vmem:[#allocation11 + $0xf0] sm:$0xff]
        %v570 = vld [vmem:[#allocation11 + $0xf8] sm:$0xff]
        %v571 = vld [vmem:[#allocation11 + $0x100] sm:$0xff]
        %v572 = vld [vmem:[#allocation11 + $0x108] sm:$0xff]
        %v573 = vld [vmem:[#allocation11 + $0x110] sm:$0xff]
        %v574 = vld [vmem:[#allocation11 + $0x118] sm:$0xff]
        %v575 = vld [vmem:[#allocation11 + $0x120] sm:$0xff]
        %v576 = vld [vmem:[#allocation11 + $0x128] sm:$0xff]
        %v577 = vld [vmem:[#allocation11 + $0x130] sm:$0xff]
        %v578 = vld [vmem:[#allocation11 + $0x138] sm:$0xff]
        %v579 = vld [vmem:[#allocation11 + $0x140] sm:$0xff]
        %v580 = vld [vmem:[#allocation11 + $0x148] sm:$0xff]
        %v581 = vld [vmem:[#allocation11 + $0x150] sm:$0xff]
        %v582 = vld [vmem:[#allocation11 + $0x158] sm:$0xff]
        %v583 = vld [vmem:[#allocation11 + $0x160] sm:$0xff]
        %v584 = vld [vmem:[#allocation11 + $0x168] sm:$0xff]
        %v585 = vld [vmem:[#allocation11 + $0x170] sm:$0xff]
        %v586 = vld [vmem:[#allocation11 + $0x178] sm:$0xff]
        %v587 = vld [vmem:[#allocation11 + $0x180] sm:$0xff]
        %v588 = vld [vmem:[#allocation11 + $0x188] sm:$0xff]
        %v589 = vld [vmem:[#allocation11 + $0x190] sm:$0xff]
        %v590 = vld [vmem:[#allocation11 + $0x198] sm:$0xff]
        %v591 = vld [vmem:[#allocation11 + $0x1a0] sm:$0xff]
        %v592 = vld [vmem:[#allocation11 + $0x1a8] sm:$0xff]
        %v593 = vld [vmem:[#allocation11 + $0x1b0] sm:$0xff]
        %v594 = vld [vmem:[#allocation11 + $0x1b8] sm:$0xff]
        %v595 = vld [vmem:[#allocation11 + $0x1c0] sm:$0xff]
        %v596 = vld [vmem:[#allocation11 + $0x1c8] sm:$0xff]
        %v597 = vld [vmem:[#allocation11 + $0x1d0] sm:$0xff]
        %v598 = vld [vmem:[#allocation11 + $0x1d8] sm:$0xff]
        %v599 = vld [vmem:[#allocation11 + $0x1e0] sm:$0xff]
        %v600 = vld [vmem:[#allocation11 + $0x1e8] sm:$0xff]
        %v601 = vld [vmem:[#allocation11 + $0x1f0] sm:$0xff]
        %v602 = vld [vmem:[#allocation11 + $0x1f8] sm:$0xff]
        %v604 = vperm.slane %v538, 0
        %v605 = vperm.slane %v538, 1
        %608 = vmatpush.msra.mxu0 %v569
        %609 = vmatpush.msra.mxu0 %v567
        %610 = vmatpush.msra.mxu0 %v565
        %611 = vmatpush.msra.mxu0 %v563
        %612 = vmatpush.msra.mxu0 %v561
        %613 = vmatpush.msra.mxu0 %v559
        %614 = vmatpush.msra.mxu0 %v557
        %615 = vmatpush.msra.mxu0 %v555
        %616 = vmatpush.msra.mxu0 %v553
        %617 = vmatpush.msra.mxu0 %v551
        %618 = vmatpush.msra.mxu0 %v549
        %619 = vmatpush.msra.mxu0 %v547
        %620 = vmatpush.msra.mxu0 %v545
        %621 = vmatpush.msra.mxu0 %v543
        %622 = vmatpush.msra.mxu0 %v541
        %623 = vmatpush.msra.mxu0 %v539
        %624 = vmatmul.f32.gmra.mxu0 %v604
        %v625 = vpop.f32.mrf.mxu0
        %v626 = vadd.f32 0.0, %v625
        %627 = vdwg.mxu0
        %628 = vmatpush.msra.mxu0 %v601
        %629 = vmatpush.msra.mxu0 %v599
        %630 = vmatpush.msra.mxu0 %v597
        %631 = vmatpush.msra.mxu0 %v595
        %632 = vmatpush.msra.mxu0 %v593
        %633 = vmatpush.msra.mxu0 %v591
        %634 = vmatpush.msra.mxu0 %v589
        %635 = vmatpush.msra.mxu0 %v587
        %636 = vmatpush.msra.mxu0 %v585
        %637 = vmatpush.msra.mxu0 %v583
        %638 = vmatpush.msra.mxu0 %v581
        %639 = vmatpush.msra.mxu0 %v579
        %640 = vmatpush.msra.mxu0 %v577
        %641 = vmatpush.msra.mxu0 %v575
        %642 = vmatpush.msra.mxu0 %v573
        %643 = vmatpush.msra.mxu0 %v571
        %644 = vmatmul.f32.gmra.mxu0 %v605
        %v645 = vpop.f32.mrf.mxu0
        %v646 = vadd.f32 %v626, %v645
        %647 = vdwg.mxu0
        %648 = vmatpush.msra.mxu0 %v570
        %649 = vmatpush.msra.mxu0 %v568
        %650 = vmatpush.msra.mxu0 %v566
        %651 = vmatpush.msra.mxu0 %v564
        %652 = vmatpush.msra.mxu0 %v562
        %653 = vmatpush.msra.mxu0 %v560
        %654 = vmatpush.msra.mxu0 %v558
        %655 = vmatpush.msra.mxu0 %v556
        %656 = vmatpush.msra.mxu0 %v554
        %657 = vmatpush.msra.mxu0 %v552
        %658 = vmatpush.msra.mxu0 %v550
        %659 = vmatpush.msra.mxu0 %v548
        %660 = vmatpush.msra.mxu0 %v546
        %661 = vmatpush.msra.mxu0 %v544
        %662 = vmatpush.msra.mxu0 %v542
        %663 = vmatpush.msra.mxu0 %v540
        %664 = vmatmul.f32.gmra.mxu0 %v604
        %v665 = vpop.f32.mrf.mxu0
        %v666 = vadd.f32 0.0, %v665
        %667 = vdwg.mxu0
        %668 = vmatpush.msra.mxu0 %v602
        %669 = vmatpush.msra.mxu0 %v600
        %670 = vmatpush.msra.mxu0 %v598
        %671 = vmatpush.msra.mxu0 %v596
        %672 = vmatpush.msra.mxu0 %v594
        %673 = vmatpush.msra.mxu0 %v592
        %674 = vmatpush.msra.mxu0 %v590
        %675 = vmatpush.msra.mxu0 %v588
        %676 = vmatpush.msra.mxu0 %v586
        %677 = vmatpush.msra.mxu0 %v584
        %678 = vmatpush.msra.mxu0 %v582
        %679 = vmatpush.msra.mxu0 %v580
        %680 = vmatpush.msra.mxu0 %v578
        %681 = vmatpush.msra.mxu0 %v576
        %682 = vmatpush.msra.mxu0 %v574
        %683 = vmatpush.msra.mxu0 %v572
        %684 = vmatmul.f32.gmra.mxu0 %v605
        %v685 = vpop.f32.mrf.mxu0
        %v686 = vadd.f32 %v666, %v685
        %687 = vdwg.mxu0
        %v690 = vrot.slane %v686, 7
        %vm691 = vcmask 1040384
        %v692 = vsel %vm691, %v646, %v690
        %vm694 = vcmp.lt.s32.totalorder %v411, 256
        %vm695 = vmand %vm412, %vm694
        %696 = vst.msk [vmem:[%s300] sm:$0x3] %vm695, %v692
        %s697 = sand.u32 %s125, 1
        %s698 = scalar_lea.sflag [#allocation7], %s697
        %s699 = sand.u32 %s125, 1
        %s700 = smul.addr %s699, 16
        %s701 = scalar_lea.vmem [#allocation13], %s700
        %s702 = sand.u32 %s151, 1
        %s703 = scalar_lea.sflag [#allocation15], %s702
        %s704 = sand.u32 %s151, 1
        %s705 = smul.addr %s704, 2
        %s706 = scalar_lea.vmem [#allocation14], %s705
        // Predicated region
        $region53: #{tpu_custom_call.1} parent=35 // pred_check
          %p707 = pneg %p135
        $region54: #{tpu_custom_call.1} parent=35 // pred_check_branch
          %709 = sbr.rel (%p707) target = $region56
        $region55: #{tpu_custom_call.1} parent=35 // pred_region
          %711 = vsyncadd %s698, 0
          %s712 = smul.addr %s28, 2
          %s713 = smul.addr %s712, 8
          %s714 = scalar_lea.hbm %s4, %s713
          %s715 = sshll.u32 %s701, 4
          %s716 = int_to_ptr.vmem [resolvable:$true] %s715
          %s717 = sshll.u32 %s714, 4
          %s718 = int_to_ptr.hbm [resolvable:$true] %s717
          %723 = dma.vmem_to_hbm [thread:$0]  %s716, 256, %s718, %s698, 128, 128, 8
        $region56: #{tpu_custom_call.1} parent=35 // pred_fallthru
          _
        // Predicated region
        $region57: #{tpu_custom_call.1} parent=35 // pred_check
          %p724 = pneg %p161
        $region58: #{tpu_custom_call.1} parent=35 // pred_check_branch
          %726 = sbr.rel (%p724) target = $region60
        $region59: #{tpu_custom_call.1} parent=35 // pred_region
          %728 = vsyncadd %s703, 0
          %s729 = smul.addr %s28, 2
          %s730 = scalar_lea.hbm %s5, %s729
          %s732 = sshll.u32 %s706, 4
          %s733 = int_to_ptr.vmem [resolvable:$true] %s732
          %s734 = sshll.u32 %s730, 4
          %s735 = int_to_ptr.hbm [resolvable:$true] %s734
          %737 = dma.vmem_to_hbm [thread:$0]  %s733, 32, %s735, %s703
        $region60: #{tpu_custom_call.1} parent=35 // pred_fallthru
          _
      $region36: #{tpu_custom_call.1} parent=5 // pred_fallthru
        _
      %p738 = scmp.le.s32.totalorder 2, %s23
      // Predicated region
      $region61: #{tpu_custom_call.1} parent=5 // pred_check
        %p739 = pneg %p738
      $region62: #{tpu_custom_call.1} parent=5 // pred_check_branch
        %741 = sbr.rel (%p739) target = $region64
      $region63: #{tpu_custom_call.1} parent=5 // pred_region
        %s742 = ssub.s32 %s23, 2
        // Predicated region
        $region65: #{tpu_custom_call.1} parent=63 // pred_check
          %p743 = pneg %p141
        $region66: #{tpu_custom_call.1} parent=63 // pred_check_branch
          %745 = sbr.rel (%p743) target = $region68
        $region67: #{tpu_custom_call.1} parent=63 // pred_region
          %s746 = sand.u32 %s126, 1
          %s747 = scalar_lea.sflag [#allocation7], %s746
          %s748 = sand.u32 %s126, 1
          %s749 = smul.addr %s748, 16
          %s750 = scalar_lea.vmem [#allocation13], %s749
          %752 = dma.done %s747, 256
        $region68: #{tpu_custom_call.1} parent=63 // pred_fallthru
          _
        // Predicated region
        $region69: #{tpu_custom_call.1} parent=63 // pred_check
          %p753 = pneg %p167
        $region70: #{tpu_custom_call.1} parent=63 // pred_check_branch
          %755 = sbr.rel (%p753) target = $region72
        $region71: #{tpu_custom_call.1} parent=63 // pred_region
          %s756 = sand.u32 %s152, 1
          %s757 = scalar_lea.sflag [#allocation15], %s756
          %s758 = sand.u32 %s152, 1
          %s759 = smul.addr %s758, 2
          %s760 = scalar_lea.vmem [#allocation14], %s759
          %762 = dma.done %s757, 32
        $region72: #{tpu_custom_call.1} parent=63 // pred_fallthru
          _
      $region64: #{tpu_custom_call.1} parent=5 // pred_fallthru
        _
    $region6: #{tpu_custom_call.1} parent=1 // loop_footer
      %s27 = sadd.s32 1, %s23
    $region7: #{tpu_custom_call.1} parent=1 // loop_footer_branch
      %22 = sbr.rel target = $region3
    $region8: #{tpu_custom_call.1} parent=1 // loop_exit
      _
    %763 = vsyncpa [#allocation6], 1
    %s764 = scalar_lea.sflag [#allocation6], 1
    %765 = vsyncpa %s764, 1
    %766 = vsyncpa [#allocation9], 1
    %767 = vsyncpa [#allocation12], 1
    %768 = vsyncpa [#allocation7], 1
    %s769 = scalar_lea.sflag [#allocation7], 1
    %770 = vsyncpa %s769, 1
    %771 = vsyncpa [#allocation15], 1
    %s772 = scalar_lea.sflag [#allocation15], 1
    %773 = vsyncpa %s772, 1

</llo_original>
